<compile_context>
chip_gen: v7x
topology: tpu7x:2x2x1
jax: 0.10.0
libtpu: 0.0.40
codegen_flags: <defaults>
</compile_context>

<pallas_src>
import functools

import jax
import jax.numpy as jnp
from jax import lax
from jax.experimental import pallas as pl
from jax.experimental.pallas import tpu as pltpu


def _sae_kernel(x_ref, we_ref, be_ref, wd_ref, sparse_ref, recon_ref, *, k):
    # ---- encoder: [tb,D] @ [D,H] on MXU (bf16 operands, f32 acc) ----
    feats = jnp.dot(x_ref[...], we_ref[...], preferred_element_type=jnp.float32)
    feats = jnp.maximum(feats + be_ref[...], 0.0)            # [tb, H] f32

    H = feats.shape[-1]
    if k is None or k >= H:
        sparse = feats
    else:
        # ---- exact k-th largest per row via bitwise bisection (radix select)
        # on the int32 bitcast: for non-negative IEEE f32 values integer order
        # == numeric order, so greedily building the largest threshold T with
        # count(bits >= T) >= k yields exactly the k-th largest value.
        # Fixed 31 iterations, independent of k.
        bits = pltpu.bitcast(feats, jnp.int32)                # [tb, H]

        def step(_, carry):
            prefix, bit = carry                               # [tb,1] i32, i32
            cand = prefix | bit
            cnt = jnp.sum((bits >= cand).astype(jnp.int32), axis=-1,
                          keepdims=True)                      # [tb, 1]
            prefix = jnp.where(cnt >= k, cand, prefix)
            return prefix, jnp.right_shift(bit, 1)

        prefix, _ = lax.fori_loop(
            0, 31, step,
            (jnp.zeros((feats.shape[0], 1), jnp.int32), jnp.int32(1 << 30)))
        thresh = pltpu.bitcast(prefix, jnp.float32)           # [tb,1] k-th value
        sparse = jnp.where(feats >= thresh, feats, 0.0)
        # TODO(synk): torch.topk tie-breaking is not reproduced — exact ties at
        # the k-th value are all kept (values identical; support may exceed k).

    sparse_ref[...] = sparse.astype(sparse_ref.dtype)

    # ---- decoder: [tb,H] @ [H,D] on MXU (bf16 operands, f32 acc), no bias ----
    recon_ref[...] = jnp.dot(sparse.astype(wd_ref.dtype), wd_ref[...],
                             preferred_element_type=jnp.float32
                             ).astype(recon_ref.dtype)


def _round_up(n, m):
    return ((n + m - 1) // m) * m


def _vmem_limit_bytes():
    """~78% of physical VMEM: ~50 MiB on v7x (64 MiB/TC), ~100 MiB on v5e/v6e."""
    try:
        cap = int(pltpu.get_tpu_info().vmem_capacity_bytes)
    except Exception:
        cap = 128 << 20
    return (cap * 25) // 32


def _auto_tile_b(B, D, H, sparse_bytes, recon_bytes, vmem_budget, cap=256):
    """Largest batch tile (multiple of 8, <= cap) that fits the VMEM budget."""
    # Resident single-buffered bf16 weights + f32 bias.
    weight_bytes = 2 * H * D * 2 + H * 4
    # Per-batch-row live bytes: double-buffered bf16 x tile, double-buffered
    # output tiles, ~3 f32 [tb,H] in-kernel intermediates (feats/bits/select)
    # and the bf16 decoder-input cast.
    per_row = (2 * D * 2
               + 2 * H * sparse_bytes
               + 2 * D * recon_bytes
               + 3 * H * 4
               + H * 2)
    avail = vmem_budget - weight_bytes
    tb = avail // per_row if avail > 0 else 8
    tb = min(int(tb), cap, _round_up(B, 8))
    tb = max((tb // 8) * 8, 8)
    return tb


def prepare_sae_params(w_enc, b_enc, w_dec):
    """One-time prep (cache across forwards): bf16 cast + pre-transpose so both
    in-kernel matmuls are canonical [M,K] @ [K,N] with no per-step relayout."""
    we_t = jnp.asarray(w_enc, jnp.bfloat16).T             # [D, H]
    be = jnp.asarray(b_enc, jnp.float32).reshape(1, -1)   # [1, H]
    wd_t = jnp.asarray(w_dec, jnp.bfloat16).T             # [H, D]
    return we_t, be, wd_t


def topk_sae_forward_prepared(x, we_t, be, wd_t, k, *, max_tile_b=256,
                              sparse_dtype=jnp.float32,
                              recon_dtype=jnp.float32):
    """x: [B, D].  we_t: [D, H] bf16.  be: [1, H] f32.  wd_t: [H, D] bf16."""
    B, D = x.shape
    H = we_t.shape[1]
    assert we_t.shape == (D, H) and wd_t.shape == (H, D) and be.shape == (1, H)
    if k is not None:
        assert k > 0, "k must be positive"

    x_bf = x.astype(jnp.bfloat16)

    sparse_bytes = jnp.dtype(sparse_dtype).itemsize
    recon_bytes = jnp.dtype(recon_dtype).itemsize
    vmem_limit = _vmem_limit_bytes()
    tb = _auto_tile_b(B, D, H, sparse_bytes, recon_bytes,
                      (vmem_limit * 7) // 8, cap=max_tile_b)

    Bp = _round_up(B, tb)
    if Bp != B:
        x_bf = jnp.pad(x_bf, ((0, Bp - B), (0, 0)))

    grid = (Bp // tb,)
    kernel = functools.partial(_sae_kernel, k=k)

    cost = pl.CostEstimate(
        flops=4 * Bp * D * H,                      # encoder + decoder matmuls
        transcendentals=0,
        bytes_accessed=(Bp * D * 2 + 2 * H * D * 2 + H * 4
                        + Bp * H * sparse_bytes + Bp * D * recon_bytes),
    )

    resident = dict(pipeline_mode=pl.Buffered(1))   # constant index_map operands
    sparse, recon = pl.pallas_call(
        kernel,
        out_shape=(
            jax.ShapeDtypeStruct((Bp, H), sparse_dtype),
            jax.ShapeDtypeStruct((Bp, D), recon_dtype),
        ),
        grid=grid,
        in_specs=[
            pl.BlockSpec((tb, D), lambda i: (i, 0)),               # x (pipelined)
            pl.BlockSpec((D, H), lambda i: (0, 0), **resident),    # W_enc^T
            pl.BlockSpec((1, H), lambda i: (0, 0), **resident),    # b_enc
            pl.BlockSpec((H, D), lambda i: (0, 0), **resident),    # W_dec^T
        ],
        out_specs=(
            pl.BlockSpec((tb, H), lambda i: (i, 0)),
            pl.BlockSpec((tb, D), lambda i: (i, 0)),
        ),
        compiler_params=pltpu.CompilerParams(
            dimension_semantics=("parallel",),       # megacore sharding on v7x
            vmem_limit_bytes=vmem_limit,
        ),
        cost_estimate=cost,
    )(x_bf, we_t, be, wd_t)

    return sparse[:B], recon[:B]


def topk_sae_forward(x, w_enc, b_enc, w_dec, k, **kwargs):
    """Convenience wrapper (torch layouts: w_enc [H,D], b_enc [H], w_dec [D,H]).
    In a loop, cache prepare_sae_params output instead of re-casting per call."""
    we_t, be, wd_t = prepare_sae_params(w_enc, b_enc, w_dec)
    return topk_sae_forward_prepared(x, we_t, be, wd_t, k, **kwargs)


def _reference(x, w_enc, b_enc, w_dec, k):
    """Same math with the same bf16-operand / f32-accumulate quantization."""
    feats = jnp.dot(x.astype(jnp.bfloat16), w_enc.astype(jnp.bfloat16).T,
                    preferred_element_type=jnp.float32)
    feats = jnp.maximum(feats + b_enc[None, :], 0.0)
    if k is not None and k < feats.shape[-1]:
        vals, idx = lax.top_k(feats, k)
        sparse = jnp.zeros_like(feats).at[
            jnp.arange(feats.shape[0])[:, None], idx].set(vals)
    else:
        sparse = feats
    recon = jnp.dot(sparse.astype(jnp.bfloat16), w_dec.astype(jnp.bfloat16).T,
                    preferred_element_type=jnp.float32)
    return sparse, recon


if __name__ == "__main__":
    # Small shapes consistent with the module: x is [batch, input_dim].
    batch, input_dim, hidden_dim, k = 8, 64, 128, 10

    key = jax.random.PRNGKey(0)
    kx, kwe, kbe, kwd = jax.random.split(key, 4)

    x = jax.random.normal(kx, (batch, input_dim), jnp.float32)
    # Deterministic init mimicking torch.nn.Linear's uniform(-1/sqrt(fan_in), ...)
    lim_e = 1.0 / jnp.sqrt(jnp.float32(input_dim))
    lim_d = 1.0 / jnp.sqrt(jnp.float32(hidden_dim))
    w_enc = jax.random.uniform(kwe, (hidden_dim, input_dim), jnp.float32,
                               -lim_e, lim_e)
    b_enc = jax.random.uniform(kbe, (hidden_dim,), jnp.float32, -lim_e, lim_e)
    w_dec = jax.random.uniform(kwd, (input_dim, hidden_dim), jnp.float32,
                               -lim_d, lim_d)

    sparse, recon = topk_sae_forward(x, w_enc, b_enc, w_dec, k)
    jax.block_until_ready((sparse, recon))

    ref_sparse, ref_recon = _reference(x, w_enc, b_enc, w_dec, k)
    assert sparse.shape == (batch, hidden_dim)
    assert recon.shape == (batch, input_dim)
    assert jnp.allclose(sparse, ref_sparse, atol=2e-2, rtol=2e-2)
    assert jnp.allclose(recon, ref_recon, atol=2e-2, rtol=2e-2)

    print("KERNEL_OK")
</pallas_src>

<mosaic_0001>
module attributes {stable_mosaic.version = 11 : i64} {
  func.func @_sae_kernel(%arg0: i32, %arg1: memref<8x64xbf16, #tpu.memory_space<vmem>>, %arg2: memref<64x128xbf16, #tpu.memory_space<vmem>>, %arg3: memref<1x128xf32, #tpu.memory_space<vmem>>, %arg4: memref<128x64xbf16, #tpu.memory_space<vmem>>, %arg5: memref<8x128xf32, #tpu.memory_space<vmem>>, %arg6: memref<8x64xf32, #tpu.memory_space<vmem>>) attributes {dimension_semantics = [#tpu.dimension_semantics<parallel>], iteration_bounds = array<i64: 1>, scalar_prefetch = 0 : i64, scratch_operands = 0 : i64, tpu.core_type = #tpu.core_type<tc>, window_params = [{transform_indices = @transform_0, window_bounds = array<i64: 8, 64>}, {pipeline_mode = #tpu.pipeline_mode<synchronous>, transform_indices = @transform_1, window_bounds = array<i64: 64, 128>}, {pipeline_mode = #tpu.pipeline_mode<synchronous>, transform_indices = @transform_2, window_bounds = array<i64: 1, 128>}, {pipeline_mode = #tpu.pipeline_mode<synchronous>, transform_indices = @transform_3, window_bounds = array<i64: 128, 64>}, {transform_indices = @transform_4, window_bounds = array<i64: 8, 128>}, {transform_indices = @transform_5, window_bounds = array<i64: 8, 64>}]} {
    %c0 = arith.constant 0 : index
    %c0_0 = arith.constant 0 : index
    %0 = vector.load %arg1[%c0, %c0_0] : memref<8x64xbf16, #tpu.memory_space<vmem>>, vector<8x64xbf16>
    %c0_1 = arith.constant 0 : index
    %c0_2 = arith.constant 0 : index
    %1 = vector.load %arg2[%c0_1, %c0_2] : memref<64x128xbf16, #tpu.memory_space<vmem>>, vector<64x128xbf16>
    %cst = arith.constant dense<0.000000e+00> : vector<8x128xf32>
    %2 = tpu.matmul %0, %1, %cst {dimension_numbers = #tpu.dot_dimension_numbers<[1], [0], [0], [1], [0, 0, 1, 1], [], []>} : vector<8x64xbf16>, vector<64x128xbf16>, vector<8x128xf32> -> vector<8x128xf32>
    %c0_3 = arith.constant 0 : index
    %c0_4 = arith.constant 0 : index
    %3 = vector.load %arg3[%c0_3, %c0_4] : memref<1x128xf32, #tpu.memory_space<vmem>>, vector<1x128xf32>
    %4 = vector.broadcast %3 : vector<1x128xf32> to vector<8x128xf32>
    %5 = arith.addf %2, %4 : vector<8x128xf32>
    %cst_5 = arith.constant 0.000000e+00 : f32
    %6 = vector.broadcast %cst_5 : f32 to vector<8x128xf32>
    %7 = arith.maximumf %5, %6 : vector<8x128xf32>
    %8 = tpu.bitcast %7 : vector<8x128xf32> -> vector<8x128xi32>
    %c0_i32 = arith.constant 0 : i32
    %9 = vector.broadcast %c0_i32 : i32 to vector<8x1xi32>
    %c1073741824_i32 = arith.constant 1073741824 : i32
    %c0_i32_6 = arith.constant 0 : i32
    %c31_i32 = arith.constant 31 : i32
    %10 = arith.addi %c0_i32_6, %c31_i32 : i32
    %c1_i32 = arith.constant 1 : i32
    %11:2 = scf.for %arg7 = %c0_i32_6 to %10 step %c1_i32 iter_args(%arg8 = %9, %arg9 = %c1073741824_i32) -> (vector<8x1xi32>, i32)  : i32 {
      %22 = vector.broadcast %arg9 : i32 to vector<8x1xi32>
      %23 = arith.ori %arg8, %22 : vector<8x1xi32>
      %24 = vector.broadcast %23 : vector<8x1xi32> to vector<8x128xi32>
      %25 = arith.cmpi sge, %8, %24 : vector<8x128xi32>
      %26 = arith.extui %25 : vector<8x128xi1> to vector<8x128xi32>
      %cst_15 = arith.constant dense<0> : vector<8xi32>
      %27 = vector.multi_reduction <add>, %26, %cst_15 [1] : vector<8x128xi32> to vector<8xi32>
      %28 = vector.shape_cast %27 : vector<8xi32> to vector<8x1xi32>
      %c10_i32 = arith.constant 10 : i32
      %29 = vector.broadcast %c10_i32 : i32 to vector<8x1xi32>
      %30 = arith.cmpi sge, %28, %29 : vector<8x1xi32>
      %31 = arith.select %30, %23, %arg8 : vector<8x1xi1>, vector<8x1xi32>
      %c1_i32_16 = arith.constant 1 : i32
      %32 = arith.shrsi %arg9, %c1_i32_16 : i32
      scf.yield %31, %32 : vector<8x1xi32>, i32
    }
    %12 = tpu.bitcast %11#0 : vector<8x1xi32> -> vector<8x1xf32>
    %13 = vector.broadcast %12 : vector<8x1xf32> to vector<8x128xf32>
    %14 = arith.cmpf oge, %7, %13 : vector<8x128xf32>
    %cst_7 = arith.constant 0.000000e+00 : f32
    %15 = vector.broadcast %cst_7 : f32 to vector<8x128xf32>
    %16 = arith.select %14, %7, %15 : vector<8x128xi1>, vector<8x128xf32>
    %c0_8 = arith.constant 0 : index
    %c0_9 = arith.constant 0 : index
    %17 = vector.load %arg5[%c0_8, %c0_9] : memref<8x128xf32, #tpu.memory_space<vmem>>, vector<8x128xf32>
    tpu.vector_store %arg5[%c0_8, %c0_9], %16 {strides = array<i32>} : memref<8x128xf32, #tpu.memory_space<vmem>>, vector<8x128xf32>,
    %18 = arith.truncf %16 : vector<8x128xf32> to vector<8x128xbf16>
    %c0_10 = arith.constant 0 : index
    %c0_11 = arith.constant 0 : index
    %19 = vector.load %arg4[%c0_10, %c0_11] : memref<128x64xbf16, #tpu.memory_space<vmem>>, vector<128x64xbf16>
    %cst_12 = arith.constant dense<0.000000e+00> : vector<8x64xf32>
    %20 = tpu.matmul %18, %19, %cst_12 {dimension_numbers = #tpu.dot_dimension_numbers<[1], [0], [0], [1], [0, 0, 1, 1], [], []>} : vector<8x128xbf16>, vector<128x64xbf16>, vector<8x64xf32> -> vector<8x64xf32>
    %c0_13 = arith.constant 0 : index
    %c0_14 = arith.constant 0 : index
    %21 = vector.load %arg6[%c0_13, %c0_14] : memref<8x64xf32, #tpu.memory_space<vmem>>, vector<8x64xf32>
    tpu.vector_store %arg6[%c0_13, %c0_14], %20 {strides = array<i32>} : memref<8x64xf32, #tpu.memory_space<vmem>>, vector<8x64xf32>,
    return
  }
  func.func @transform_0(%arg0: i32) -> (i32, i32) {
    %c0_i32 = arith.constant 0 : i32
    %c0_i32_0 = arith.constant 0 : i32
    return %arg0, %c0_i32 : i32, i32
  }
  func.func @transform_1(%arg0: i32) -> (i32, i32) {
    %c0_i32 = arith.constant 0 : i32
    %c0_i32_0 = arith.constant 0 : i32
    %c0_i32_1 = arith.constant 0 : i32
    return %c0_i32, %c0_i32_0 : i32, i32
  }
  func.func @transform_2(%arg0: i32) -> (i32, i32) {
    %c0_i32 = arith.constant 0 : i32
    %c0_i32_0 = arith.constant 0 : i32
    %c0_i32_1 = arith.constant 0 : i32
    return %c0_i32, %c0_i32_0 : i32, i32
  }
  func.func @transform_3(%arg0: i32) -> (i32, i32) {
    %c0_i32 = arith.constant 0 : i32
    %c0_i32_0 = arith.constant 0 : i32
    %c0_i32_1 = arith.constant 0 : i32
    return %c0_i32, %c0_i32_0 : i32, i32
  }
  func.func @transform_4(%arg0: i32) -> (i32, i32) {
    %c0_i32 = arith.constant 0 : i32
    %c0_i32_0 = arith.constant 0 : i32
    return %arg0, %c0_i32 : i32, i32
  }
  func.func @transform_5(%arg0: i32) -> (i32, i32) {
    %c0_i32 = arith.constant 0 : i32
    %c0_i32_0 = arith.constant 0 : i32
    return %arg0, %c0_i32 : i32, i32
  }
}

</mosaic_0001>

<llo_original>
// kernel: tpu_custom_call.1
$region0: #{tpu_custom_call.1}
  #allocation0 [shape = 'u32[]', space=smem, size = 0x4, offset = 0x4, fixed_abs, tag = 'smem constant byte address 0x4 - core index']
  #allocation1 [shape = 'u32[144,128]{1,0:T(1,128)}', space=vmem, size = 0x12000, scoped, tag = 'internal scratch']
  %s0 = inlined_call_operand.hbm [shape: bf16[8,64], index: 0, kind: input, shape index: {}]
  %s1 = inlined_call_operand.hbm [shape: bf16[64,128], index: 1, kind: input, shape index: {}]
  %s2 = inlined_call_operand.hbm [shape: f32[1,128], index: 2, kind: input, shape index: {}]
  %s3 = inlined_call_operand.hbm [shape: bf16[128,64], index: 3, kind: input, shape index: {}]
  %s4 = inlined_call_operand.hbm [shape: f32[8,128], index: 4, kind: output, shape index: {0}]
  %s5 = inlined_call_operand.hbm [shape: f32[8,64], index: 5, kind: output, shape index: {1}]
  %6 = xla_tuple %s4, %s5
  %s7 = sld [smem:[#allocation0]]
  $region57: #{tpu_custom_call.1} parent=0
    _
  %s9 = ssub.s32 1, %s7
  %s10 = scalar_select 0, %s9, %s7
  $region1: #{tpu_custom_call.1} parent=0
    #allocation2 [shape = 'u8[2048]{0}', space=vmem, size = 0x800, scoped, tag = 'input window, operand 0, single buffered']
    #allocation3 [shape = 's32[1]{0}', space=sflag, size = 0x4, scoped, tag = 'scoped memory for tpu_custom_call.1']
    #allocation4 [shape = 's32[1]{0}', space=sflag, size = 0x4, scoped, tag = 'scoped memory for tpu_custom_call.1']
    #allocation5 [shape = 'u8[16384]{0}', space=vmem, size = 0x4000, scoped, tag = 'input window, operand 1, single buffered']
    #allocation6 [shape = 's32[1]{0}', space=sflag, size = 0x4, scoped, tag = 'scoped memory for tpu_custom_call.1']
    #allocation7 [shape = 'u8[512]{0}', space=vmem, size = 0x400, scoped, tag = 'input window, operand 2, single buffered']
    #allocation8 [shape = 'u8[32768]{0}', space=vmem, size = 0x8000, scoped, tag = 'input window, operand 3, single buffered']
    #allocation9 [shape = 's32[1]{0}', space=sflag, size = 0x4, scoped, tag = 'scoped memory for tpu_custom_call.1']
    #allocation10 [shape = 'u8[4096]{0}', space=vmem, size = 0x1000, scoped, tag = 'output window, operand 0, single buffered']
    #allocation11 [shape = 'u8[4096]{0}', space=vmem, size = 0x1000, scoped, tag = 'output window, operand 1, single buffered']
    #allocation12 [shape = 's32[1]{0}', space=sflag, size = 0x4, scoped, tag = 'scoped memory for tpu_custom_call.1']
    %11 = vsyncpa [#allocation3], 0
    %12 = vsyncpa [#allocation6], 0
    %13 = vsyncpa [#allocation9], 0
    %14 = vsyncpa [#allocation4], 0
    %15 = vsyncpa [#allocation12], 0
    // Predicated region
    $region2: #{tpu_custom_call.1} parent=1 // pred_check
      _
    $region3: #{tpu_custom_call.1} parent=1 // pred_check_branch
      %17 = sbr.rel (0) target = $region5
    $region4: #{tpu_custom_call.1} parent=1 // pred_region
      %s19 = ssub.s32 64, 64
      %20 = vsyncadd [#allocation3], %s19
      %s22 = sshll.u32 [#allocation2], 4
      %s23 = int_to_ptr.vmem [resolvable:$true] %s22
      %25 = dma.hbm_to_vmem [thread:$0]  %s0, 64, %s23, [#allocation3]
    $region5: #{tpu_custom_call.1} parent=1 // pred_fallthru
      _
    // Predicated region
    $region6: #{tpu_custom_call.1} parent=1 // pred_check
      _
    $region7: #{tpu_custom_call.1} parent=1 // pred_check_branch
      %27 = sbr.rel (0) target = $region9
    $region8: #{tpu_custom_call.1} parent=1 // pred_region
      %s29 = ssub.s32 512, 512
      %30 = vsyncadd [#allocation6], %s29
      %s31 = sshll.u32 [#allocation5], 4
      %s32 = int_to_ptr.vmem [resolvable:$true] %s31
      %37 = dma.hbm_to_vmem [thread:$0]  %s1, 512, %s32, [#allocation6], 64, 64, 4
    $region9: #{tpu_custom_call.1} parent=1 // pred_fallthru
      _
    // Predicated region
    $region10: #{tpu_custom_call.1} parent=1 // pred_check
      _
    $region11: #{tpu_custom_call.1} parent=1 // pred_check_branch
      %39 = sbr.rel (0) target = $region13
    $region12: #{tpu_custom_call.1} parent=1 // pred_region
      %s41 = ssub.s32 16, 16
      %42 = vsyncadd [#allocation6], %s41
      %s44 = sshll.u32 [#allocation7], 4
      %s45 = int_to_ptr.vmem [resolvable:$true] %s44
      %47 = dma.hbm_to_vmem [thread:$0]  %s2, 16, %s45, [#allocation6]
    $region13: #{tpu_custom_call.1} parent=1 // pred_fallthru
      _
    // Predicated region
    $region14: #{tpu_custom_call.1} parent=1 // pred_check
      _
    $region15: #{tpu_custom_call.1} parent=1 // pred_check_branch
      %49 = sbr.rel (0) target = $region17
    $region16: #{tpu_custom_call.1} parent=1 // pred_region
      %s51 = ssub.s32 1024, 1024
      %52 = vsyncadd [#allocation9], %s51
      %s53 = sshll.u32 [#allocation8], 4
      %s54 = int_to_ptr.vmem [resolvable:$true] %s53
      %59 = dma.hbm_to_vmem [thread:$0]  %s3, 1024, %s54, [#allocation9], 64, 64, 4
    $region17: #{tpu_custom_call.1} parent=1 // pred_fallthru
      _
    // Predicated region
    $region18: #{tpu_custom_call.1} parent=1 // pred_check
      _
    $region19: #{tpu_custom_call.1} parent=1 // pred_check_branch
      %61 = sbr.rel (0) target = $region21
    $region20: #{tpu_custom_call.1} parent=1 // pred_region
      %62 = dma.done [#allocation3], 64
    $region21: #{tpu_custom_call.1} parent=1 // pred_fallthru
      _
    // Predicated region
    $region22: #{tpu_custom_call.1} parent=1 // pred_check
      _
    $region23: #{tpu_custom_call.1} parent=1 // pred_check_branch
      %64 = sbr.rel (0) target = $region25
    $region24: #{tpu_custom_call.1} parent=1 // pred_region
      %65 = dma.done [#allocation6], 512
    $region25: #{tpu_custom_call.1} parent=1 // pred_fallthru
      _
    // Predicated region
    $region26: #{tpu_custom_call.1} parent=1 // pred_check
      _
    $region27: #{tpu_custom_call.1} parent=1 // pred_check_branch
      %67 = sbr.rel (0) target = $region29
    $region28: #{tpu_custom_call.1} parent=1 // pred_region
      %68 = dma.done [#allocation6], 16
    $region29: #{tpu_custom_call.1} parent=1 // pred_fallthru
      _
    // Predicated region
    $region30: #{tpu_custom_call.1} parent=1 // pred_check
      _
    $region31: #{tpu_custom_call.1} parent=1 // pred_check_branch
      %70 = sbr.rel (0) target = $region33
    $region32: #{tpu_custom_call.1} parent=1 // pred_region
      %71 = dma.done [#allocation9], 1024
    $region33: #{tpu_custom_call.1} parent=1 // pred_fallthru
      _
    %v73 = vld [vmem:[#allocation2] sm:$0xf]
    %v74 = vld [vmem:[#allocation5] sm:$0xf]
    %v75 = vld [vmem:[#allocation5 + $0x4] sm:$0xf]
    %v76 = vld [vmem:[#allocation5 + $0x8] sm:$0xf]
    %v77 = vld [vmem:[#allocation5 + $0xc] sm:$0xf]
    %v78 = vld [vmem:[#allocation5 + $0x10] sm:$0xf]
    %v79 = vld [vmem:[#allocation5 + $0x14] sm:$0xf]
    %v80 = vld [vmem:[#allocation5 + $0x18] sm:$0xf]
    %v81 = vld [vmem:[#allocation5 + $0x1c] sm:$0xf]
    %v82 = vld [vmem:[#allocation7] sm:$0x1]
    %v84 = vlaneseq
    %v85 = vshrl.u32 %v84, 7
    %v86 = vsub.s32 0, %v85
    %v87 = vrot.slane %v82, %v86
    %v97 = vunpack.c.l.b16 %v74
    %v98 = vunpack.c.l.b16 %v75
    %v99 = vunpack.c.l.b16 %v76
    %v100 = vunpack.c.l.b16 %v77
    %v101 = vunpack.c.l.b16 %v78
    %v102 = vunpack.c.l.b16 %v79
    %v103 = vunpack.c.l.b16 %v80
    %v104 = vunpack.c.l.b16 %v81
    %v105 = vpack.c.b16 %v98, %v97
    %v106 = vpack.c.b16 %v100, %v99
    %v107 = vpack.c.b16 %v102, %v101
    %v108 = vpack.c.b16 %v104, %v103
    %vm113 = vcmask 523264
    %v115 = vsel %vm113, %v73, 0
    %117 = vmatprep.subr.bf16.mxu0 0
    %118 = vmatpush1.bf16.msra.mxu0 %v105
    %119 = vmatprep.subr.bf16.mxu0 0
    %120 = vmatpush1.bf16.msra.mxu0 %v106
    %121 = vmatprep.subr.bf16.mxu0 0
    %122 = vmatpush1.bf16.msra.mxu0 %v107
    %123 = vmatprep.subr.bf16.mxu0 0
    %124 = vmatpush1.bf16.msra.mxu0 %v108
    %125 = vmatprep.subr.bf16.mxu0 0
    %126 = vmatpush1.bf16.msra.mxu0 0
    %127 = vmatprep.subr.bf16.mxu0 0
    %128 = vmatpush1.bf16.msra.mxu0 0
    %129 = vmatprep.subr.bf16.mxu0 0
    %130 = vmatpush1.bf16.msra.mxu0 0
    %131 = vmatprep.subr.bf16.mxu0 0
    %132 = vmatpush1.bf16.msra.mxu0 0
    %133 = vmatprep.subr.bf16.mxu0 0
    %134 = vmatpush1.bf16.msra.mxu0 0
    %135 = vmatprep.subr.bf16.mxu0 0
    %136 = vmatpush1.bf16.msra.mxu0 0
    %137 = vmatprep.subr.bf16.mxu0 0
    %138 = vmatpush1.bf16.msra.mxu0 0
    %139 = vmatprep.subr.bf16.mxu0 0
    %140 = vmatpush1.bf16.msra.mxu0 0
    %141 = vmatprep.subr.bf16.mxu0 0
    %142 = vmatpush1.bf16.msra.mxu0 0
    %143 = vmatprep.subr.bf16.mxu0 0
    %144 = vmatpush1.bf16.msra.mxu0 0
    %145 = vmatprep.subr.bf16.mxu0 0
    %146 = vmatpush1.bf16.msra.mxu0 0
    %147 = vmatprep.subr.bf16.mxu0 0
    %148 = vmatpush1.bf16.msra.mxu0 0
    %149 = vmatprep.mubr.bf16.mxu0 0
    %150 = vmatmul.mubr.bf16.gmra.mrb[0].mxu0 %v115
    %v151 = vpop.f32.mrb[0].mxu0
    %v152 = vadd.f32 %v87, %v151
    %v153 = vpop.f32.mrb[0].mxu0
    %v154 = vpop.f32.mrb[0].mxu0
    %v155 = vpop.f32.mrb[0].mxu0
    %156 = vdwg.mxu0
    %v157 = vmax.f32 %v152, 0.0
    loop: start=0, step=1, limit=31
    $region34: #{tpu_custom_call.1} parent=1 // loop_pre_header
      _
    $region35: #{tpu_custom_call.1} parent=1 // loop_header
      %s160 = sphi 0, %s164
      %p161 = scmp.ge.s32.totalorder %s160, 31
      %v165 = vphi 0, %v184
      %s166 = sphi 1073741824, %s185
    $region36: #{tpu_custom_call.1} parent=1 // loop_header_branch
      %163 = sbr.rel (%p161) target = $region40
    $region37: #{tpu_custom_call.1} parent=1 // loop_body
      %v167 = vstv %s166
      %v168 = vor.u32 %v165, %v167
      %vm169 = vcmp.ge.s32.totalorder %v157, %v168
      %v170 = vsel %vm169, 1, 0
      %v171 = vand.u32 %v170, 65535
      %v172 = vshrl.u32 %v170, 16
      %v173 = vcvt.s32.f32 %v171
      %v174 = vcvt.s32.f32 %v172
      %175 = vadd.xlane.f32.xlu0 %v173
      %v176 = vpop.xlane.xlu0 %175
      %177 = vadd.xlane.f32.xlu0 %v174
      %v178 = vpop.xlane.xlu0 %177
      %v179 = vcvt.f32.s32 %v176
      %v180 = vcvt.f32.s32 %v178
      %v181 = vshll.u32 %v180, 16
      %v182 = vadd.s32 %v181, %v179
      %vm183 = vcmp.ge.s32.totalorder %v182, 10
      %v184 = vsel %vm183, %v168, %v165
      %s185 = sshra.s32 %s166, 1
    $region38: #{tpu_custom_call.1} parent=1 // loop_footer
      %s164 = sadd.s32 1, %s160
    $region39: #{tpu_custom_call.1} parent=1 // loop_footer_branch
      %159 = sbr.rel target = $region35
    $region40: #{tpu_custom_call.1} parent=1 // loop_exit
      _
    %vm187 = vcmp.ge.f32.partialorder %v157, %v165
    %v188 = vsel %vm187, %v157, 0.0
    %189 = vst [vmem:[#allocation10] sm:$0xff] %v188
    %v190 = vpack.c.bf16 %v188, %v188
    %v191 = vld [vmem:[#allocation8] sm:$0xf]
    %v192 = vld [vmem:[#allocation8 + $0x4] sm:$0xf]
    %v193 = vld [vmem:[#allocation8 + $0x8] sm:$0xf]
    %v194 = vld [vmem:[#allocation8 + $0xc] sm:$0xf]
    %v195 = vld [vmem:[#allocation8 + $0x10] sm:$0xf]
    %v196 = vld [vmem:[#allocation8 + $0x14] sm:$0xf]
    %v197 = vld [vmem:[#allocation8 + $0x18] sm:$0xf]
    %v198 = vld [vmem:[#allocation8 + $0x1c] sm:$0xf]
    %v199 = vld [vmem:[#allocation8 + $0x20] sm:$0xf]
    %v200 = vld [vmem:[#allocation8 + $0x24] sm:$0xf]
    %v201 = vld [vmem:[#allocation8 + $0x28] sm:$0xf]
    %v202 = vld [vmem:[#allocation8 + $0x2c] sm:$0xf]
    %v203 = vld [vmem:[#allocation8 + $0x30] sm:$0xf]
    %v204 = vld [vmem:[#allocation8 + $0x34] sm:$0xf]
    %v205 = vld [vmem:[#allocation8 + $0x38] sm:$0xf]
    %v206 = vld [vmem:[#allocation8 + $0x3c] sm:$0xf]
    %v223 = vunpack.c.l.b16 %v191
    %v224 = vunpack.c.l.b16 %v192
    %v225 = vunpack.c.l.b16 %v193
    %v226 = vunpack.c.l.b16 %v194
    %v227 = vunpack.c.l.b16 %v195
    %v228 = vunpack.c.l.b16 %v196
    %v229 = vunpack.c.l.b16 %v197
    %v230 = vunpack.c.l.b16 %v198
    %v231 = vunpack.c.l.b16 %v199
    %v232 = vunpack.c.l.b16 %v200
    %v233 = vunpack.c.l.b16 %v201
    %v234 = vunpack.c.l.b16 %v202
    %v235 = vunpack.c.l.b16 %v203
    %v236 = vunpack.c.l.b16 %v204
    %v237 = vunpack.c.l.b16 %v205
    %v238 = vunpack.c.l.b16 %v206
    %v239 = vpack.c.b16 %v224, %v223
    %v240 = vpack.c.b16 %v226, %v225
    %v241 = vpack.c.b16 %v228, %v227
    %v242 = vpack.c.b16 %v230, %v229
    %v243 = vpack.c.b16 %v232, %v231
    %v244 = vpack.c.b16 %v234, %v233
    %v245 = vpack.c.b16 %v236, %v235
    %v246 = vpack.c.b16 %v238, %v237
    %255 = vmatprep.subr.bf16.mxu0 0
    %256 = vmatpush1.bf16.msra.mxu0 %v239
    %257 = vmatprep.subr.bf16.mxu0 0
    %258 = vmatpush1.bf16.msra.mxu0 %v240
    %259 = vmatprep.subr.bf16.mxu0 0
    %260 = vmatpush1.bf16.msra.mxu0 %v241
    %261 = vmatprep.subr.bf16.mxu0 0
    %262 = vmatpush1.bf16.msra.mxu0 %v242
    %263 = vmatprep.subr.bf16.mxu0 0
    %264 = vmatpush1.bf16.msra.mxu0 %v243
    %265 = vmatprep.subr.bf16.mxu0 0
    %266 = vmatpush1.bf16.msra.mxu0 %v244
    %267 = vmatprep.subr.bf16.mxu0 0
    %268 = vmatpush1.bf16.msra.mxu0 %v245
    %269 = vmatprep.subr.bf16.mxu0 0
    %270 = vmatpush1.bf16.msra.mxu0 %v246
    %271 = vmatprep.subr.bf16.mxu0 0
    %272 = vmatpush1.bf16.msra.mxu0 0
    %273 = vmatprep.subr.bf16.mxu0 0
    %274 = vmatpush1.bf16.msra.mxu0 0
    %275 = vmatprep.subr.bf16.mxu0 0
    %276 = vmatpush1.bf16.msra.mxu0 0
    %277 = vmatprep.subr.bf16.mxu0 0
    %278 = vmatpush1.bf16.msra.mxu0 0
    %279 = vmatprep.subr.bf16.mxu0 0
    %280 = vmatpush1.bf16.msra.mxu0 0
    %281 = vmatprep.subr.bf16.mxu0 0
    %282 = vmatpush1.bf16.msra.mxu0 0
    %283 = vmatprep.subr.bf16.mxu0 0
    %284 = vmatpush1.bf16.msra.mxu0 0
    %285 = vmatprep.subr.bf16.mxu0 0
    %286 = vmatpush1.bf16.msra.mxu0 0
    %287 = vmatprep.mubr.bf16.mxu0 0
    %288 = vmatmul.mubr.bf16.gmra.mrb[0].mxu0 %v190
    %v289 = vpop.f32.mrb[0].mxu0
    %v290 = vadd.f32 0.0, %v289
    %v291 = vpop.f32.mrb[0].mxu0
    %v292 = vpop.f32.mrb[0].mxu0
    %v293 = vpop.f32.mrb[0].mxu0
    %294 = vdwg.mxu0
    %295 = vst.msk [vmem:[#allocation11] sm:$0xff] %vm113, %v290
    // Predicated region
    $region41: #{tpu_custom_call.1} parent=1 // pred_check
      _
    $region42: #{tpu_custom_call.1} parent=1 // pred_check_branch
      %297 = sbr.rel (0) target = $region44
    $region43: #{tpu_custom_call.1} parent=1 // pred_region
      %s299 = ssub.s32 128, 128
      %300 = vsyncadd [#allocation4], %s299
      %s302 = sshll.u32 [#allocation10], 4
      %s303 = int_to_ptr.vmem [resolvable:$true] %s302
      %305 = dma.vmem_to_hbm [thread:$0]  %s303, 128, %s4, [#allocation4]
    $region44: #{tpu_custom_call.1} parent=1 // pred_fallthru
      _
    // Predicated region
    $region45: #{tpu_custom_call.1} parent=1 // pred_check
      _
    $region46: #{tpu_custom_call.1} parent=1 // pred_check_branch
      %307 = sbr.rel (0) target = $region48
    $region47: #{tpu_custom_call.1} parent=1 // pred_region
      %s309 = ssub.s32 128, 128
      %310 = vsyncadd [#allocation12], %s309
      %s312 = sshll.u32 [#allocation11], 4
      %s313 = int_to_ptr.vmem [resolvable:$true] %s312
      %315 = dma.vmem_to_hbm [thread:$0]  %s313, 128, %s5, [#allocation12]
    $region48: #{tpu_custom_call.1} parent=1 // pred_fallthru
      _
    // Predicated region
    $region49: #{tpu_custom_call.1} parent=1 // pred_check
      _
    $region50: #{tpu_custom_call.1} parent=1 // pred_check_branch
      %317 = sbr.rel (0) target = $region52
    $region51: #{tpu_custom_call.1} parent=1 // pred_region
      %318 = dma.done [#allocation4], 128
    $region52: #{tpu_custom_call.1} parent=1 // pred_fallthru
      _
    // Predicated region
    $region53: #{tpu_custom_call.1} parent=1 // pred_check
      _
    $region54: #{tpu_custom_call.1} parent=1 // pred_check_branch
      %320 = sbr.rel (0) target = $region56
    $region55: #{tpu_custom_call.1} parent=1 // pred_region
      %321 = dma.done [#allocation12], 128
    $region56: #{tpu_custom_call.1} parent=1 // pred_fallthru
      _
    %322 = vsyncpa [#allocation3], 1
    %323 = vsyncpa [#allocation6], 1
    %324 = vsyncpa [#allocation9], 1
    %325 = vsyncpa [#allocation4], 1
    %326 = vsyncpa [#allocation12], 1

</llo_original>
